<compile_context>
chip_gen: v5e
topology: v5e:2x2
jax: 0.10.0
libtpu: 0.0.40
codegen_flags: <defaults>
</compile_context>

<pallas_src>
import functools

import numpy as np

import jax
import jax.numpy as jnp
from jax import lax
from jax.experimental import pallas as pl
from jax.experimental.pallas import tpu as pltpu


def _round_up(x, m):
    return (x + m - 1) // m * m


@functools.lru_cache(maxsize=None)
def _vmem_limit_bytes():
    """Per-call VMEM cap derived from hardware (64 MiB/TC on v7x, 128 on
    v5e/v6e), leaving headroom for double-buffered inputs and temporaries."""
    cap = 64 * 1024 * 1024
    try:
        cap = int(getattr(pltpu.get_tpu_info(), "vmem_capacity_bytes", cap))
    except Exception:
        pass
    return max(32 * 1024 * 1024, min(100 * 1024 * 1024, (cap * 3) // 4))


def _stage_tiling(num_groups, k, target_rows=4096):
    """Groups per tile: multiple of 128 so the pooled [C2, gpt] output store is
    lane-dense; k*gpt rows (~4096) per tile amortize grid-step overhead."""
    gpt = max(128, (target_rows // max(k, 1)) // 128 * 128)
    gpt = min(gpt, _round_up(num_groups, 128))
    return gpt, _round_up(num_groups, gpt)


# ----------------------------------------------------------------------------
# Kernel 1: raw_point_embed (1x1 Conv1d + folded BN + ReLU), channels-first.
# 3->D projection done as VPU broadcast FMAs; lane-dense [D, rows] stores.
# ----------------------------------------------------------------------------
def _embed_kernel(x_ref, w_ref, b_ref, o_ref, *, cin):
    x = x_ref[...]                                   # [Cin, tm] f32
    w = w_ref[...]                                   # [D, Cin] f32
    if cin <= 8:
        acc = w[:, 0:1] * x[0:1, :]
        for c in range(1, cin):
            acc = acc + w[:, c:c + 1] * x[c:c + 1, :]
    else:
        acc = jnp.dot(w, x, preferred_element_type=jnp.float32)
    o_ref[...] = jnp.maximum(acc + b_ref[...], 0.0).astype(o_ref.dtype)


def embed_forward(x_cf, w_t, b, *, tile=2048):
    """x_cf: [Cin, M] f32, w_t: [D, Cin] f32, b: [D, 1] f32 -> [D, M] bf16."""
    Cin, M = x_cf.shape
    D = w_t.shape[0]
    tm = min(tile, _round_up(M, 128))
    M_pad = _round_up(M, tm)
    if M_pad > M:
        x_cf = jnp.pad(x_cf, ((0, 0), (0, M_pad - M)))
    kern = functools.partial(_embed_kernel, cin=Cin)
    out = pl.pallas_call(
        kern,
        out_shape=jax.ShapeDtypeStruct((D, M_pad), jnp.bfloat16),
        grid_spec=pltpu.PrefetchScalarGridSpec(
            num_scalar_prefetch=0,
            grid=(M_pad // tm,),
            in_specs=[pl.BlockSpec((Cin, tm), lambda i: (0, i)),
                      pl.BlockSpec((D, Cin), lambda i: (0, 0)),
                      pl.BlockSpec((D, 1), lambda i: (0, 0))],
            out_specs=pl.BlockSpec((D, tm), lambda i: (0, i)),
        ),
        compiler_params=pltpu.CompilerParams(
            dimension_semantics=("parallel",),
            vmem_limit_bytes=_vmem_limit_bytes()),
    )(x_cf, w_t, b)
    return out[:, :M]


# ----------------------------------------------------------------------------
# Kernel 2: fused pairwise distance + top-K neighbor selection.
# No [B, G, N] HBM intermediate; only [B, K, G] int32 indices are written.
# ----------------------------------------------------------------------------
def _knn_kernel(q_ref, p_ref, idx_ref, *, k):
    q = q_ref[...]                                   # [bt, G, 3] f32
    p = p_ref[...]                                   # [bt, 3, N] f32 (lane=N)
    qq = jnp.sum(q * q, axis=-1, keepdims=True)      # [bt, G, 1]
    pp = jnp.sum(p * p, axis=1, keepdims=True)       # [bt, 1, N]
    # -2 q.p^T via three VPU broadcast FMAs (avoid a K=3 MXU contraction)
    qp = (q[:, :, 0:1] * p[:, 0:1, :]
          + q[:, :, 1:2] * p[:, 1:2, :]
          + q[:, :, 2:3] * p[:, 2:3, :])             # [bt, G, N]
    d = (qq + pp) - 2.0 * qp                         # [bt, G, N]
    n = d.shape[-1]
    iota = lax.broadcasted_iota(jnp.int32, d.shape, dimension=2)
    inf = jnp.float32(jnp.inf)
    # TODO(synk): tie-breaking may differ from torch.topk(sorted=False).
    for kk in range(k):
        m = jnp.min(d, axis=-1, keepdims=True)                   # [bt, G, 1]
        hit = d == m
        idx = jnp.min(jnp.where(hit, iota, n), axis=-1)          # [bt, G] i32
        idx_ref[:, kk, :] = idx
        d = jnp.where(iota == idx[:, :, None], inf, d)


def knn_indices(lc_xyz, xyz_t, k):
    """lc_xyz: [B, G, 3] f32, xyz_t: [B, 3, N] f32 -> knn indices [B, G, K]."""
    B, G, _ = lc_xyz.shape
    N = xyz_t.shape[2]
    # size bt from a VMEM budget for the in-kernel [bt, G, N] distance temp
    budget = 4 * 1024 * 1024
    bt = max(1, min(B, budget // max(G * N * 4, 1)))
    B_pad = _round_up(B, bt)
    if B_pad > B:
        lc_xyz = jnp.pad(lc_xyz, ((0, B_pad - B), (0, 0), (0, 0)))
        xyz_t = jnp.pad(xyz_t, ((0, B_pad - B), (0, 0), (0, 0)))
    kern = functools.partial(_knn_kernel, k=k)
    idx = pl.pallas_call(
        kern,
        out_shape=jax.ShapeDtypeStruct((B_pad, k, G), jnp.int32),
        grid_spec=pltpu.PrefetchScalarGridSpec(
            num_scalar_prefetch=0,
            grid=(B_pad // bt,),
            in_specs=[pl.BlockSpec((bt, G, 3), lambda i: (i, 0, 0)),
                      pl.BlockSpec((bt, 3, N), lambda i: (i, 0, 0))],
            out_specs=pl.BlockSpec((bt, k, G), lambda i: (i, 0, 0)),
        ),
        compiler_params=pltpu.CompilerParams(
            dimension_semantics=("parallel",),
            vmem_limit_bytes=_vmem_limit_bytes()),
    )(lc_xyz, xyz_t)
    return jnp.transpose(idx[:B], (0, 2, 1))          # [B, G, K]


# ----------------------------------------------------------------------------
# Kernel 3: fused LGA stage = PosE_Geo + N x Linear2Layer + max-over-K Pooling
# Channels-first: activations [C2, k*gpt], pooled output [C2, gpt].
# ----------------------------------------------------------------------------
def _stage_kernel(xyzn_ref, knnx_ref, lcx_ref, cmat_ref, offs_ref, *rest,
                  n_blocks, k, gpt):
    o_ref = rest[-1]
    wrefs = rest[:-1]

    # positional embedding: phase ramp (3 VPU FMAs) + single sin
    # (cos == sin(x + pi/2), offsets folded into `offs`)
    xyz = xyzn_ref[...]                              # [3, tm] f32
    cm = cmat_ref[...]                               # [C2, 3] f32
    ph = (cm[:, 0:1] * xyz[0:1, :]
          + cm[:, 1:2] * xyz[1:2, :]
          + cm[:, 2:3] * xyz[2:3, :]) + offs_ref[...]
    pose = jnp.sin(ph)                               # [C2, tm] f32

    # broadcast center features over the K neighbors (columns are neighbor-
    # major: r = kk*gpt + g), gpt is a multiple of 128 -> lane-aligned copies
    knn = knnx_ref[...].astype(jnp.float32)          # [C, tm]
    lc = lcx_ref[...].astype(jnp.float32)            # [C, gpt]
    lc_t = jnp.concatenate([lc] * k, axis=1)         # [C, tm]
    # sublane (axis-0) concat at 8-aligned offset, then add pose
    x = jnp.concatenate([knn, lc_t], axis=0) + pose  # [C2, tm] f32

    # Linear2Layer residual blocks (BN folded); channels-first matmuls:
    # rows (tm) stay on the MXU-N / lane axis -> dense result tiles & stores
    for j in range(n_blocks):
        w1t, b1, w2t, b2 = wrefs[4 * j:4 * j + 4]    # [H,C2],[H,1],[C2,H],[C2,1]
        h = jnp.dot(w1t[...], x.astype(jnp.bfloat16),
                    preferred_element_type=jnp.float32) + b1[...]
        h = jnp.maximum(h, 0.0)
        y = jnp.dot(w2t[...], h.astype(jnp.bfloat16),
                    preferred_element_type=jnp.float32) + b2[...]
        x = jnp.maximum(y + x, 0.0)

    # max over K neighbors: K lane-aligned slice-maxes (pure VPU)
    pooled = x[:, 0:gpt]
    for kk in range(1, k):
        pooled = jnp.maximum(pooled, x[:, kk * gpt:(kk + 1) * gpt])
    o_ref[...] = pooled.astype(o_ref.dtype)


def lga_stage(xyz_n, knn_feat, lc_feat, cmat, offs, blocks, *, k, gpt):
    """xyz_n: [3, M_pad] f32, knn_feat: [C, M_pad] bf16, lc_feat: [C, BG_pad]
    bf16, cmat: [C2, 3] f32, offs: [C2, 1] f32 -> pooled [C2, BG_pad] bf16."""
    C, M_pad = knn_feat.shape
    C2 = cmat.shape[0]
    BG_pad = lc_feat.shape[1]
    tm = k * gpt
    n_tiles = BG_pad // gpt
    n_blocks = len(blocks)

    in_specs = [pl.BlockSpec((3, tm), lambda i: (0, i)),
                pl.BlockSpec((C, tm), lambda i: (0, i)),
                pl.BlockSpec((C, gpt), lambda i: (0, i)),
                pl.BlockSpec((C2, 3), lambda i: (0, 0)),
                pl.BlockSpec((C2, 1), lambda i: (0, 0))]
    args = [xyz_n, knn_feat, lc_feat, cmat, offs]
    for (w1t, b1, w2t, b2) in blocks:
        H = w1t.shape[0]
        in_specs += [pl.BlockSpec((H, C2), lambda i: (0, 0)),
                     pl.BlockSpec((H, 1), lambda i: (0, 0)),
                     pl.BlockSpec((C2, H), lambda i: (0, 0)),
                     pl.BlockSpec((C2, 1), lambda i: (0, 0))]
        args += [w1t, b1, w2t, b2]

    kern = functools.partial(_stage_kernel, n_blocks=n_blocks, k=k, gpt=gpt)
    return pl.pallas_call(
        kern,
        out_shape=jax.ShapeDtypeStruct((C2, BG_pad), jnp.bfloat16),
        grid_spec=pltpu.PrefetchScalarGridSpec(
            num_scalar_prefetch=0,
            grid=(n_tiles,),
            in_specs=in_specs,
            out_specs=pl.BlockSpec((C2, gpt), lambda i: (0, i)),
        ),
        compiler_params=pltpu.CompilerParams(
            dimension_semantics=("parallel",),
            vmem_limit_bytes=_vmem_limit_bytes()),
    )(*args)


# ----------------------------------------------------------------------------
# Host-side constants and parameter folding
# ----------------------------------------------------------------------------
def _pose_constants(out_dim, alpha, beta):
    """Channels-first phase coefficients matching torch PosE_Geo layout:
    channel j = coord*(2*fd) + [sin freqs | cos freqs]."""
    assert out_dim % 6 == 0, "PosE_Geo requires out_dim divisible by 6"
    fd = out_dim // 6
    j = np.arange(out_dim)
    d = j // (2 * fd)
    r = j % (2 * fd)
    freq = np.where(r < fd, r, r - fd).astype(np.float32)
    coef = np.float32(beta) / np.power(np.float32(alpha), freq / np.float32(fd))
    cmat = np.zeros((out_dim, 3), np.float32)
    cmat[j, d] = coef
    offs = np.where(r < fd, 0.0, np.pi / 2.0).astype(np.float32)[:, None]
    return jnp.asarray(cmat), jnp.asarray(offs)


def fold_bn(w, b, gamma, beta_, mean, var, eps=1e-5):
    """Fold eval-mode BatchNorm into a [Cin, Cout] weight and [Cout] bias."""
    scale = gamma / jnp.sqrt(var + eps)
    w_f = w * scale[None, :]
    if b is None:
        b = jnp.zeros_like(mean)
    b_f = (b - mean) * scale + beta_
    return w_f, b_f


def init_params(key, in_channels, embed_dim, num_stages, dim_expansion, LGA_block):
    keys = jax.random.split(key, 64)
    ki = iter(range(64))

    def nxt():
        return keys[next(ki)]

    params = {}
    # raw_point_embed: Conv1d(in -> embed, k=1, bias=False) + BN1d + ReLU
    w = jax.random.normal(nxt(), (in_channels, embed_dim), jnp.float32) * 0.1
    w_f, b_f = fold_bn(w, None,
                       jnp.ones((embed_dim,)), jnp.zeros((embed_dim,)),
                       jnp.zeros((embed_dim,)), jnp.ones((embed_dim,)))
    params['embed'] = (jnp.transpose(w_f).astype(jnp.float32),       # [D, Cin]
                       b_f.reshape(embed_dim, 1).astype(jnp.float32))

    out_dim = embed_dim
    stages = []
    for i in range(num_stages):
        out_dim = out_dim * dim_expansion[i]
        hidden = 32 if i == 2 else out_dim // 2      # Linear2Layer(adapter_layer=i)
        blocks = []
        for _ in range(LGA_block[i]):
            w1 = jax.random.normal(nxt(), (out_dim, hidden), jnp.float32) * 0.05
            b1 = jax.random.normal(nxt(), (hidden,), jnp.float32) * 0.05
            w2 = jax.random.normal(nxt(), (hidden, out_dim), jnp.float32) * 0.05
            b2 = jax.random.normal(nxt(), (out_dim,), jnp.float32) * 0.05
            w1f, b1f = fold_bn(w1, b1, jnp.ones((hidden,)), jnp.zeros((hidden,)),
                               jnp.zeros((hidden,)), jnp.ones((hidden,)))
            w2f, b2f = fold_bn(w2, b2, jnp.ones((out_dim,)), jnp.zeros((out_dim,)),
                               jnp.zeros((out_dim,)), jnp.ones((out_dim,)))
            blocks.append((jnp.transpose(w1f).astype(jnp.bfloat16),   # [H, 2C]
                           b1f.reshape(hidden, 1).astype(jnp.float32),
                           jnp.transpose(w2f).astype(jnp.bfloat16),   # [2C, H]
                           b2f.reshape(out_dim, 1).astype(jnp.float32)))
        stages.append(blocks)
    params['stages'] = stages
    return params


# ----------------------------------------------------------------------------
# Full forward (EncP inside Point_PN_scan)
# ----------------------------------------------------------------------------
def point_pn_scan_forward(x, xyz, params, *, input_points, num_stages, k_neighbors,
                          alpha, beta, type_='mn40', fps_key=None):
    """x: [B, in_channels, N] (torch Conv1d NCW), xyz: [B, N, 3].
    Returns (xyz [B, G_last, 3], feat [B, C_last, G_last]) like the torch module."""
    B, Cin, N = x.shape
    K = k_neighbors

    # raw_point_embed (Linear1Layer), channels-first
    we_t, be = params['embed']
    x_cf = jnp.transpose(x, (1, 0, 2)).reshape(Cin, B * N)
    cur_feat_cf = embed_forward(x_cf, we_t, be)                  # [D, B*N] bf16
    cur_xyz = xyz                                                # [B, N, 3] f32

    if fps_key is None:
        fps_key = jax.random.PRNGKey(1)

    group_num = input_points
    for i in range(num_stages):
        group_num //= 2
        G = group_num
        Ncur = cur_xyz.shape[1]
        C = cur_feat_cf.shape[0]
        BG = B * G

        # TODO(synk): original discards FPS and uses torch.randint; we use
        # jax.random.randint with a fixed key for determinism.
        fps_key, sub = jax.random.split(fps_key)
        fps_idx = jax.random.randint(sub, (B, G), 0, Ncur, dtype=jnp.int32)

        xyz_flat = cur_xyz.reshape(B * Ncur, 3)
        xyz_cf = jnp.transpose(xyz_flat)                          # [3, B*Ncur]
        batch_off = (jnp.arange(B, dtype=jnp.int32) * Ncur)[:, None]
        lc_flat = (fps_idx + batch_off).reshape(BG)
        lc_xyz = jnp.take(xyz_flat, lc_flat, axis=0).reshape(B, G, 3)

        # fused distance + top-K kernel (no [B,G,N] HBM intermediate)
        xyz_t = jnp.transpose(cur_xyz, (0, 2, 1))                 # [B, 3, Ncur]
        knn_idx = knn_indices(lc_xyz, xyz_t, K)                   # [B, G, K]
        knn_flat = (knn_idx + batch_off[:, :, None]).reshape(BG, K)

        # tile layout: gpt groups per tile, columns neighbor-major (r = kk*gpt+g)
        gpt, BG_pad = _stage_tiling(BG, K)
        pad_g = BG_pad - BG
        lc_flat_p = jnp.pad(lc_flat, (0, pad_g)) if pad_g else lc_flat
        knn_flat_p = jnp.pad(knn_flat, ((0, pad_g), (0, 0))) if pad_g else knn_flat
        n_tiles = BG_pad // gpt

        knn_ord = knn_flat_p.reshape(n_tiles, gpt, K).transpose(0, 2, 1).reshape(-1)
        lc_ord = jnp.broadcast_to(lc_flat_p.reshape(n_tiles, 1, gpt),
                                  (n_tiles, K, gpt)).reshape(-1)

        # channels-first gathers (XLA) directly in kernel layout
        knn_feat = jnp.take(cur_feat_cf, knn_ord, axis=1)          # [C, M_pad]
        lc_feat = jnp.take(cur_feat_cf, lc_flat_p, axis=1)         # [C, BG_pad]
        diff = (jnp.take(xyz_cf, knn_ord, axis=1)
                - jnp.take(xyz_cf, lc_ord, axis=1))                # [3, M_pad]

        # LGA geometric normalization (padded columns have diff == 0 exactly)
        if type_ == 'mn40':
            n_elem = BG * K * 3
            n_pad = (BG_pad - BG) * K * 3
            mean = jnp.sum(diff) / n_elem
            ss = jnp.sum((diff - mean) ** 2) - n_pad * mean * mean  # two-pass
            var = ss / (n_elem - 1)                                 # torch.std (unbiased)
            std = jnp.sqrt(jnp.maximum(var, 0.0))
            xyz_n = diff / (std + 1e-5)
        else:  # 'scan'
            d4 = diff.reshape(3, n_tiles, K, gpt)
            den = jnp.max(jnp.abs(d4), axis=2, keepdims=True)
            den = jnp.where(den == 0.0, 1.0, den)                   # guard padded groups
            xyz_n = (d4 / den).reshape(3, -1)

        # fused PosE_Geo + Linear2Layer blocks + max-over-K pooling (Pallas)
        out_dim = 2 * C
        cmat, offs = _pose_constants(out_dim, alpha, beta)
        pooled = lga_stage(xyz_n, knn_feat, lc_feat, cmat, offs,
                           params['stages'][i], k=K, gpt=gpt)       # [2C, BG_pad]

        cur_feat_cf = pooled[:, :BG]                                # [2C, B*G]
        cur_xyz = lc_xyz

    C_last = cur_feat_cf.shape[0]
    feat_out = cur_feat_cf.astype(jnp.float32).reshape(C_last, B, group_num)
    feat_out = jnp.transpose(feat_out, (1, 0, 2))                   # [B, C, G]
    return cur_xyz, feat_out


if __name__ == "__main__":
    key = jax.random.PRNGKey(0)

    # Small shapes consistent with the module (embed_dim divisible by 6 for PosE_Geo)
    B, N, Cin = 2, 64, 3
    embed_dim = 24
    num_stages = 3
    dim_expansion = [2, 2, 2, 1]
    LGA_block = [2, 1, 1, 1]
    k_neighbors = 8
    alpha, beta = 1000, 100

    kx, kxyz, kparam = jax.random.split(key, 3)
    xyz = jax.random.normal(kxyz, (B, N, 3), jnp.float32)   # [B, N, 3]
    x = jax.random.normal(kx, (B, Cin, N), jnp.float32)     # [B, C, N] (Conv1d layout)

    params = init_params(kparam, Cin, embed_dim, num_stages, dim_expansion, LGA_block)

    out_xyz, out_x = point_pn_scan_forward(
        x, xyz, params,
        input_points=N, num_stages=num_stages, k_neighbors=k_neighbors,
        alpha=alpha, beta=beta, type_='mn40',
        fps_key=jax.random.PRNGKey(42))

    jax.block_until_ready((out_xyz, out_x))
    assert out_xyz.shape == (B, N // 8, 3), out_xyz.shape
    assert out_x.shape == (B, embed_dim * 8, N // 8), out_x.shape
    assert jnp.all(jnp.isfinite(out_xyz)) and jnp.all(jnp.isfinite(out_x))
    print("KERNEL_OK")
</pallas_src>

<mosaic_0001>
module attributes {stable_mosaic.version = 11 : i64} {
  func.func @_embed_kernel(%arg0: i32, %arg1: memref<3x128xf32, #tpu.memory_space<vmem>>, %arg2: memref<24x3xf32, #tpu.memory_space<vmem>>, %arg3: memref<24x1xf32, #tpu.memory_space<vmem>>, %arg4: memref<24x128xbf16, #tpu.memory_space<vmem>>) attributes {dimension_semantics = [#tpu.dimension_semantics<parallel>], iteration_bounds = array<i64: 1>, scalar_prefetch = 0 : i64, scratch_operands = 0 : i64, tpu.core_type = #tpu.core_type<tc>, window_params = [{transform_indices = @transform_0, window_bounds = array<i64: 3, 128>}, {pipeline_mode = #tpu.pipeline_mode<synchronous>, transform_indices = @transform_1, window_bounds = array<i64: 24, 3>}, {pipeline_mode = #tpu.pipeline_mode<synchronous>, transform_indices = @transform_2, window_bounds = array<i64: 24, 1>}, {transform_indices = @transform_3, window_bounds = array<i64: 24, 128>}]} {
    %c0 = arith.constant 0 : index
    %c0_0 = arith.constant 0 : index
    %0 = vector.load %arg1[%c0, %c0_0] : memref<3x128xf32, #tpu.memory_space<vmem>>, vector<3x128xf32>
    %c0_1 = arith.constant 0 : index
    %c0_2 = arith.constant 0 : index
    %1 = vector.load %arg2[%c0_1, %c0_2] : memref<24x3xf32, #tpu.memory_space<vmem>>, vector<24x3xf32>
    %2 = vector.extract_strided_slice %1 {offsets = [0, 0], sizes = [24, 1], strides = [1, 1]} : vector<24x3xf32> to vector<24x1xf32>
    %3 = vector.extract_strided_slice %0 {offsets = [0, 0], sizes = [1, 128], strides = [1, 1]} : vector<3x128xf32> to vector<1x128xf32>
    %4 = vector.broadcast %2 : vector<24x1xf32> to vector<24x128xf32>
    %5 = vector.broadcast %3 : vector<1x128xf32> to vector<24x128xf32>
    %6 = arith.mulf %4, %5 : vector<24x128xf32>
    %7 = vector.extract_strided_slice %1 {offsets = [0, 1], sizes = [24, 1], strides = [1, 1]} : vector<24x3xf32> to vector<24x1xf32>
    %8 = vector.extract_strided_slice %0 {offsets = [1, 0], sizes = [1, 128], strides = [1, 1]} : vector<3x128xf32> to vector<1x128xf32>
    %9 = vector.broadcast %7 : vector<24x1xf32> to vector<24x128xf32>
    %10 = vector.broadcast %8 : vector<1x128xf32> to vector<24x128xf32>
    %11 = arith.mulf %9, %10 : vector<24x128xf32>
    %12 = arith.addf %6, %11 : vector<24x128xf32>
    %13 = vector.extract_strided_slice %1 {offsets = [0, 2], sizes = [24, 1], strides = [1, 1]} : vector<24x3xf32> to vector<24x1xf32>
    %14 = vector.extract_strided_slice %0 {offsets = [2, 0], sizes = [1, 128], strides = [1, 1]} : vector<3x128xf32> to vector<1x128xf32>
    %15 = vector.broadcast %13 : vector<24x1xf32> to vector<24x128xf32>
    %16 = vector.broadcast %14 : vector<1x128xf32> to vector<24x128xf32>
    %17 = arith.mulf %15, %16 : vector<24x128xf32>
    %18 = arith.addf %12, %17 : vector<24x128xf32>
    %c0_3 = arith.constant 0 : index
    %c0_4 = arith.constant 0 : index
    %19 = vector.load %arg3[%c0_3, %c0_4] : memref<24x1xf32, #tpu.memory_space<vmem>>, vector<24x1xf32>
    %20 = vector.broadcast %19 : vector<24x1xf32> to vector<24x128xf32>
    %21 = arith.addf %18, %20 : vector<24x128xf32>
    %cst = arith.constant 0.000000e+00 : f32
    %22 = vector.broadcast %cst : f32 to vector<24x128xf32>
    %23 = arith.maximumf %21, %22 : vector<24x128xf32>
    %24 = arith.truncf %23 : vector<24x128xf32> to vector<24x128xbf16>
    %c0_5 = arith.constant 0 : index
    %c0_6 = arith.constant 0 : index
    %25 = vector.load %arg4[%c0_5, %c0_6] : memref<24x128xbf16, #tpu.memory_space<vmem>>, vector<24x128xbf16>
    tpu.vector_store %arg4[%c0_5, %c0_6], %24 {strides = array<i32>} : memref<24x128xbf16, #tpu.memory_space<vmem>>, vector<24x128xbf16>,
    return
  }
  func.func @transform_0(%arg0: i32) -> (i32, i32) {
    %c0_i32 = arith.constant 0 : i32
    %c0_i32_0 = arith.constant 0 : i32
    return %c0_i32, %arg0 : i32, i32
  }
  func.func @transform_1(%arg0: i32) -> (i32, i32) {
    %c0_i32 = arith.constant 0 : i32
    %c0_i32_0 = arith.constant 0 : i32
    %c0_i32_1 = arith.constant 0 : i32
    return %c0_i32, %c0_i32_0 : i32, i32
  }
  func.func @transform_2(%arg0: i32) -> (i32, i32) {
    %c0_i32 = arith.constant 0 : i32
    %c0_i32_0 = arith.constant 0 : i32
    %c0_i32_1 = arith.constant 0 : i32
    return %c0_i32, %c0_i32_0 : i32, i32
  }
  func.func @transform_3(%arg0: i32) -> (i32, i32) {
    %c0_i32 = arith.constant 0 : i32
    %c0_i32_0 = arith.constant 0 : i32
    return %c0_i32, %arg0 : i32, i32
  }
}

</mosaic_0001>

<llo_original>
// kernel: tpu_custom_call.1
$region0: #{tpu_custom_call.1}
  #allocation0 [shape = 'u32[]', space=smem, size = 0x4, offset = 0x4, fixed_abs, tag = 'smem constant byte address 0x4 - core index']
  #allocation1 [shape = 'u32[72,128]{1,0:T(1,128)}', space=vmem, size = 0x9000, scoped, tag = 'internal scratch']
  %s0 = inlined_call_operand.vmem [shape: f32[3,128], index: 0, kind: input, shape index: {}]
  %s1 = inlined_call_operand.vmem [shape: f32[24,3], index: 1, kind: input, shape index: {}]
  %s2 = inlined_call_operand.vmem [shape: f32[24,1], index: 2, kind: input, shape index: {}]
  %s3 = inlined_call_operand.hbm [shape: bf16[24,128], index: 3, kind: output, shape index: {}]
  %s4 = sld [smem:[#allocation0]]
  $region22: #{tpu_custom_call.1} parent=0
    _
  %s6 = ssub.s32 1, %s4
  %s7 = scalar_select 0, %s6, %s4
  $region1: #{tpu_custom_call.1} parent=0
    #allocation2 [shape = 'u8[6144]{0}', space=vmem, size = 0x1800, scoped, tag = 'output window, operand 0, single buffered']
    #allocation3 [shape = 's32[1]{0}', space=sflag, size = 0x4, scoped, tag = 'scoped memory for tpu_custom_call.1']
    %8 = vsyncpa [#allocation3], 0
    // Predicated region
    $region2: #{tpu_custom_call.1} parent=1 // pred_check
      _
    $region3: #{tpu_custom_call.1} parent=1 // pred_check_branch
      %10 = sbr.rel (0) target = $region5
    $region4: #{tpu_custom_call.1} parent=1 // pred_region
      _
    $region5: #{tpu_custom_call.1} parent=1 // pred_fallthru
      _
    // Predicated region
    $region6: #{tpu_custom_call.1} parent=1 // pred_check
      _
    $region7: #{tpu_custom_call.1} parent=1 // pred_check_branch
      %12 = sbr.rel (0) target = $region9
    $region8: #{tpu_custom_call.1} parent=1 // pred_region
      _
    $region9: #{tpu_custom_call.1} parent=1 // pred_fallthru
      _
    // Predicated region
    $region10: #{tpu_custom_call.1} parent=1 // pred_check
      _
    $region11: #{tpu_custom_call.1} parent=1 // pred_check_branch
      %14 = sbr.rel (0) target = $region13
    $region12: #{tpu_custom_call.1} parent=1 // pred_region
      _
    $region13: #{tpu_custom_call.1} parent=1 // pred_fallthru
      _
    %v15 = vld [vmem:[%s0] sm:$0x7]
    %v16 = vld [vmem:[%s1] sm:$0xff]
    %v17 = vld [vmem:[%s1 + $0x8] sm:$0xff]
    %v18 = vld [vmem:[%s1 + $0x10] sm:$0xff]
    %20 = vset.pattern.permute.xlu0 0
    %21 = vperm.xlu0 %20, %v16
    %v22 = vpop.permute.xlu0 %21
    %25 = vset.pattern.permute.xlu0 0
    %26 = vperm.xlu0 %25, %v17
    %v27 = vpop.permute.xlu0 %26
    %30 = vset.pattern.permute.xlu0 0
    %31 = vperm.xlu0 %30, %v18
    %v32 = vpop.permute.xlu0 %31
    %v34 = vperm.slane %v15, 0
    %v35 = vmul.f32 %v22, %v34
    %v36 = vmul.f32 %v27, %v34
    %v37 = vmul.f32 %v32, %v34
    %38 = vset.pattern.permute.xlu0 1
    %39 = vperm.xlu0 %38, %v16
    %v40 = vpop.permute.xlu0 %39
    %42 = vset.pattern.permute.xlu0 1
    %43 = vperm.xlu0 %42, %v17
    %v44 = vpop.permute.xlu0 %43
    %46 = vset.pattern.permute.xlu0 1
    %47 = vperm.xlu0 %46, %v18
    %v48 = vpop.permute.xlu0 %47
    %v50 = vperm.slane %v15, 1
    %v51 = vmul.f32 %v40, %v50
    %v52 = vmul.f32 %v44, %v50
    %v53 = vmul.f32 %v48, %v50
    %v54 = vadd.f32 %v35, %v51
    %v55 = vadd.f32 %v36, %v52
    %v56 = vadd.f32 %v37, %v53
    %57 = vset.pattern.permute.xlu0 2
    %58 = vperm.xlu0 %57, %v16
    %v59 = vpop.permute.xlu0 %58
    %61 = vset.pattern.permute.xlu0 2
    %62 = vperm.xlu0 %61, %v17
    %v63 = vpop.permute.xlu0 %62
    %65 = vset.pattern.permute.xlu0 2
    %66 = vperm.xlu0 %65, %v18
    %v67 = vpop.permute.xlu0 %66
    %v69 = vperm.slane %v15, 2
    %v70 = vmul.f32 %v59, %v69
    %v71 = vmul.f32 %v63, %v69
    %v72 = vmul.f32 %v67, %v69
    %v73 = vadd.f32 %v54, %v70
    %v74 = vadd.f32 %v55, %v71
    %v75 = vadd.f32 %v56, %v72
    %v76 = vld [vmem:[%s2] sm:$0xff]
    %v77 = vld [vmem:[%s2 + $0x8] sm:$0xff]
    %v78 = vld [vmem:[%s2 + $0x10] sm:$0xff]
    %80 = vset.pattern.permute.xlu0 0
    %81 = vperm.xlu0 %80, %v76
    %v82 = vpop.permute.xlu0 %81
    %85 = vset.pattern.permute.xlu0 0
    %86 = vperm.xlu0 %85, %v77
    %v87 = vpop.permute.xlu0 %86
    %90 = vset.pattern.permute.xlu0 0
    %91 = vperm.xlu0 %90, %v78
    %v92 = vpop.permute.xlu0 %91
    %v94 = vadd.f32 %v73, %v82
    %v95 = vadd.f32 %v74, %v87
    %v96 = vadd.f32 %v75, %v92
    %v97 = vmax.f32 %v94, 0.0
    %v98 = vmax.f32 %v95, 0.0
    %v99 = vmax.f32 %v96, 0.0
    %v100 = vpack.c.bf16 %v97, %v97
    %v101 = vpack.c.bf16 %v98, %v98
    %v102 = vpack.c.bf16 %v99, %v99
    %103 = vst [vmem:[#allocation2] sm:$0xf] %v100
    %104 = vst [vmem:[#allocation2 + $0x4] sm:$0xf] %v101
    %105 = vst [vmem:[#allocation2 + $0x8] sm:$0xf] %v102
    // Predicated region
    $region14: #{tpu_custom_call.1} parent=1 // pred_check
      _
    $region15: #{tpu_custom_call.1} parent=1 // pred_check_branch
      %107 = sbr.rel (0) target = $region17
    $region16: #{tpu_custom_call.1} parent=1 // pred_region
      %109 = vsyncadd [#allocation3], 0
      %s110 = sshll.u32 [#allocation2], 4
      %s111 = int_to_ptr.vmem [resolvable:$true] %s110
      %s112 = sshll.u32 %s3, 4
      %s113 = int_to_ptr.hbm [resolvable:$true] %s112
      %118 = dma.vmem_to_hbm [thread:$0]  %s111, 192, %s113, [#allocation3], 64, 64, 4
    $region17: #{tpu_custom_call.1} parent=1 // pred_fallthru
      _
    // Predicated region
    $region18: #{tpu_custom_call.1} parent=1 // pred_check
      _
    $region19: #{tpu_custom_call.1} parent=1 // pred_check_branch
      %120 = sbr.rel (0) target = $region21
    $region20: #{tpu_custom_call.1} parent=1 // pred_region
      %122 = dma.done [#allocation3], 192
    $region21: #{tpu_custom_call.1} parent=1 // pred_fallthru
      _
    %123 = vsyncpa [#allocation3], 1

</llo_original>
